<compile_context>
chip_gen: v5e
topology: v5e:2x2
jax: 0.10.0
libtpu: 0.0.40
codegen_flags: <defaults>
</compile_context>

<pallas_src>
import jax
import jax.numpy as jnp
from jax.experimental import pallas as pl
from jax.experimental.pallas import tpu as pltpu

BN_EPS = 1e-5


def _softplus(x):
    # matches torch.nn.functional.softplus (beta=1, threshold=20)
    return jnp.where(x > 20.0, x, jnp.log1p(jnp.exp(jnp.minimum(x, 20.0))))


def _batchnorm_train(x):
    # BatchNorm1d(affine=False), training-mode batch statistics over axis 0
    mean = jnp.mean(x, axis=0, keepdims=True)
    var = jnp.mean((x - mean) ** 2, axis=0, keepdims=True)
    return (x - mean) * jax.lax.rsqrt(var + BN_EPS)


def _softmax_rows(x):
    # exact row softmax; denominator is only (B,1), approx recip saves nothing
    m = jnp.max(x, axis=1, keepdims=True)
    e = jnp.exp(x - m)
    return e / jnp.sum(e, axis=1, keepdims=True)


def decoder_kernel(x_ref, w0_ref, b0_ref, w1_ref, b1_ref,
                   wms_ref, bms_ref, eps_ref, beta_ref,
                   packed_ref, wdist_ref):
    B, K = eps_ref.shape
    pad = packed_ref.shape[1] - 4 * K

    # ---- InferenceNetwork ----
    # Weights arrive as bf16 from HBM; feed bf16 x bf16 straight to the MXU
    # with f32 accumulation. Only the small activations get cast in-kernel.
    x = x_ref[...].astype(jnp.bfloat16)
    h = _softplus(jnp.dot(x, w0_ref[...],
                          preferred_element_type=jnp.float32) + b0_ref[...])
    h = _softplus(jnp.dot(h.astype(jnp.bfloat16), w1_ref[...],
                          preferred_element_type=jnp.float32) + b1_ref[...])

    # fused mu / log_sigma heads: one (B, 2K) matmul + one BatchNorm pass
    ms = jnp.dot(h.astype(jnp.bfloat16), wms_ref[...],
                 preferred_element_type=jnp.float32) + bms_ref[...]
    ms = _batchnorm_train(ms)                       # [mu | log_sigma]
    mu = ms[:, :K]
    log_sigma = ms[:, K:]

    # ---- DecoderNetwork ----
    sigma = jnp.exp(log_sigma)
    z = eps_ref[...] * jnp.sqrt(sigma) + mu         # sqrt(sigma) == exp(0.5*log_sigma)
    theta = _softmax_rows(z)
    wd = jnp.dot(theta.astype(jnp.bfloat16), beta_ref[...],
                 preferred_element_type=jnp.float32)
    word_dist = _softmax_rows(_batchnorm_train(wd))  # prodLDA branch

    # Single lane-dense, unmasked writeback: [mu | log_sigma | sigma | theta | pad]
    parts = [ms, sigma, theta]
    if pad > 0:
        parts.append(jnp.zeros((B, pad), jnp.float32))
    packed_ref[...] = jnp.concatenate(parts, axis=1)
    wdist_ref[...] = word_dist


def init_params(key, input_size, n_components, hidden_sizes):
    """Deterministic parameter init mirroring the module's shapes (f32)."""
    ks = jax.random.split(key, 8)

    def linear(kw, kb, fan_in, fan_out):
        bound = 1.0 / jnp.sqrt(fan_in)
        w = jax.random.uniform(kw, (fan_in, fan_out), jnp.float32, -bound, bound)
        b = jax.random.uniform(kb, (1, fan_out), jnp.float32, -bound, bound)
        return w, b

    h0, h1 = hidden_sizes
    w0, b0 = linear(ks[0], ks[1], input_size, h0)
    w1, b1 = linear(ks[2], ks[3], h0, h1)
    wmu, bmu = linear(ks[4], ks[5], h1, n_components)
    wsig, bsig = linear(ks[6], ks[7], h1, n_components)

    # xavier_uniform_ for beta (K, V)
    bound = jnp.sqrt(6.0 / (n_components + input_size))
    beta = jax.random.uniform(jax.random.fold_in(key, 99),
                              (n_components, input_size), jnp.float32,
                              -bound, bound)

    prior_mean = jnp.zeros((n_components,), jnp.float32)
    prior_variance = jnp.full((n_components,), 1.0 - 1.0 / n_components,
                              jnp.float32)
    return dict(w0=w0, b0=b0, w1=w1, b1=b1, wmu=wmu, bmu=bmu,
                wsig=wsig, bsig=bsig, beta=beta,
                prior_mean=prior_mean, prior_variance=prior_variance)


def prepare_params(params):
    """ONE-TIME prep (call once, reuse every step): fuse the mu/log_sigma heads
    and downcast the weight matrices to bf16 so the per-call path does no extra
    HBM round trips and the kernel DMAs half the weight bytes."""
    wms = jnp.concatenate([params["wmu"], params["wsig"]], axis=1)   # (h1, 2K)
    bms = jnp.concatenate([params["bmu"], params["bsig"]], axis=1)   # (1, 2K)
    return dict(
        w0=params["w0"].astype(jnp.bfloat16),
        b0=params["b0"],
        w1=params["w1"].astype(jnp.bfloat16),
        b1=params["b1"],
        wms=wms.astype(jnp.bfloat16),
        bms=bms,                                   # biases stay f32 (tiny)
        beta=params["beta"].astype(jnp.bfloat16),
        prior_mean=params["prior_mean"],
        prior_variance=params["prior_variance"],
    )


def decoder_network_forward(x, prepared, eps):
    B, V = x.shape
    K = eps.shape[1]
    h0 = prepared["w0"].shape[1]
    h1 = prepared["w1"].shape[1]
    packed_width = max(128, ((4 * K + 127) // 128) * 128)

    flops = int(2 * B * (V * h0 + h0 * h1 + h1 * 2 * K + K * V))
    transcendentals = int(B * (2 * h0 + 2 * h1 + 4 * K + 2 * V))
    in_bytes = (int(x.size) * x.dtype.itemsize
                + sum(int(prepared[k].size) * prepared[k].dtype.itemsize
                      for k in ("w0", "b0", "w1", "b1", "wms", "bms", "beta"))
                + int(eps.size) * eps.dtype.itemsize)
    out_bytes = B * packed_width * 4 + B * V * 4
    bytes_accessed = int(in_bytes + out_bytes)

    # VMEM budget: actual footprint plus generous margin, capped well below the
    # smallest physical VMEM (v7x: 64 MiB per TensorCore).
    try:
        physical_vmem = int(pltpu.get_tpu_info().vmem_capacity_bytes)
    except Exception:  # conservative fallback if the query is unavailable
        physical_vmem = 64 << 20
    vmem_limit = int(min(max(8 << 20, 4 * bytes_accessed),
                         (physical_vmem * 3) // 4))

    vmem = pl.BlockSpec(memory_space=pltpu.MemorySpace.VMEM)
    packed, word_dist = pl.pallas_call(
        decoder_kernel,
        out_shape=(
            jax.ShapeDtypeStruct((B, packed_width), jnp.float32),  # mu|log_sig|sigma|theta
            jax.ShapeDtypeStruct((B, V), jnp.float32),             # word_dist
        ),
        in_specs=[vmem] * 9,
        out_specs=(vmem, vmem),
        compiler_params=pltpu.CompilerParams(vmem_limit_bytes=vmem_limit),
        cost_estimate=pl.CostEstimate(flops=flops,
                                      transcendentals=transcendentals,
                                      bytes_accessed=bytes_accessed),
    )(x, prepared["w0"], prepared["b0"], prepared["w1"], prepared["b1"],
      prepared["wms"], prepared["bms"], eps, prepared["beta"])

    mu = packed[:, 0:K]
    log_sigma = packed[:, K:2 * K]
    sigma = packed[:, 2 * K:3 * K]
    theta = packed[:, 3 * K:4 * K]

    return (prepared["prior_mean"], prepared["prior_variance"],
            mu, sigma, log_sigma, word_dist, theta)


if __name__ == "__main__":
    # Small, module-consistent shapes: bag-of-words input (batch, vocab)
    batch = 8
    input_size = 256        # vocab size
    n_components = 16       # topics
    hidden_sizes = (128, 128)

    key = jax.random.PRNGKey(0)
    k_x, k_p, k_eps = jax.random.split(key, 3)

    # non-negative "counts" as input, like a BoW matrix
    x = jax.random.uniform(k_x, (batch, input_size), jnp.float32, 0.0, 3.0)
    params = init_params(k_p, input_size, n_components, hidden_sizes)
    prepared = prepare_params(params)          # one-time weight prep (bf16 + fuse)
    eps = jax.random.normal(k_eps, (batch, n_components), jnp.float32)

    outs = decoder_network_forward(x, prepared, eps)
    outs = jax.block_until_ready(outs)

    (prior_mean, prior_variance, mu, sigma, log_sigma, word_dist, theta) = outs
    assert prior_mean.shape == (n_components,)
    assert prior_variance.shape == (n_components,)
    assert mu.shape == (batch, n_components)
    assert sigma.shape == (batch, n_components)
    assert log_sigma.shape == (batch, n_components)
    assert word_dist.shape == (batch, input_size)
    assert theta.shape == (batch, n_components)
    # softmax rows should sum to ~1 (both use the exact reciprocal now)
    assert jnp.allclose(jnp.sum(theta, axis=1), 1.0, atol=1e-4)
    assert jnp.allclose(jnp.sum(word_dist, axis=1), 1.0, atol=1e-4)
    # sigma must equal exp(log_sigma)
    assert jnp.allclose(sigma, jnp.exp(log_sigma), rtol=1e-5, atol=1e-5)

    print("KERNEL_OK")
</pallas_src>

<mosaic_0001>
module attributes {stable_mosaic.version = 11 : i64} {
  func.func @decoder_kernel(%arg0: memref<8x256xf32, #tpu.memory_space<vmem>>, %arg1: memref<256x128xbf16, #tpu.memory_space<vmem>>, %arg2: memref<1x128xf32, #tpu.memory_space<vmem>>, %arg3: memref<128x128xbf16, #tpu.memory_space<vmem>>, %arg4: memref<1x128xf32, #tpu.memory_space<vmem>>, %arg5: memref<128x32xbf16, #tpu.memory_space<vmem>>, %arg6: memref<1x32xf32, #tpu.memory_space<vmem>>, %arg7: memref<8x16xf32, #tpu.memory_space<vmem>>, %arg8: memref<16x256xbf16, #tpu.memory_space<vmem>>, %arg9: memref<8x128xf32, #tpu.memory_space<vmem>>, %arg10: memref<8x256xf32, #tpu.memory_space<vmem>>) attributes {dimension_semantics = [], scalar_prefetch = 0 : i64, scratch_operands = 0 : i64, tpu.core_type = #tpu.core_type<tc>} {
    %c0 = arith.constant 0 : index
    %c0_0 = arith.constant 0 : index
    %0 = vector.load %arg0[%c0, %c0_0] : memref<8x256xf32, #tpu.memory_space<vmem>>, vector<8x256xf32>
    %1 = arith.truncf %0 : vector<8x256xf32> to vector<8x256xbf16>
    %c0_1 = arith.constant 0 : index
    %c0_2 = arith.constant 0 : index
    %2 = vector.load %arg1[%c0_1, %c0_2] : memref<256x128xbf16, #tpu.memory_space<vmem>>, vector<256x128xbf16>
    %cst = arith.constant dense<0.000000e+00> : vector<8x128xf32>
    %3 = tpu.matmul %1, %2, %cst {dimension_numbers = #tpu.dot_dimension_numbers<[1], [0], [0], [1], [0, 0, 1, 1], [], []>} : vector<8x256xbf16>, vector<256x128xbf16>, vector<8x128xf32> -> vector<8x128xf32>
    %c0_3 = arith.constant 0 : index
    %c0_4 = arith.constant 0 : index
    %4 = vector.load %arg2[%c0_3, %c0_4] : memref<1x128xf32, #tpu.memory_space<vmem>>, vector<1x128xf32>
    %5 = vector.broadcast %4 : vector<1x128xf32> to vector<8x128xf32>
    %6 = arith.addf %3, %5 : vector<8x128xf32>
    %cst_5 = arith.constant 2.000000e+01 : f32
    %7 = vector.broadcast %cst_5 : f32 to vector<8x128xf32>
    %8 = arith.cmpf ogt, %6, %7 : vector<8x128xf32>
    %cst_6 = arith.constant 2.000000e+01 : f32
    %9 = vector.broadcast %cst_6 : f32 to vector<8x128xf32>
    %10 = arith.minimumf %6, %9 : vector<8x128xf32>
    %11 = math.exp %10 : vector<8x128xf32>
    %12 = math.log1p %11 : vector<8x128xf32>
    %13 = arith.select %8, %6, %12 : vector<8x128xi1>, vector<8x128xf32>
    %14 = arith.truncf %13 : vector<8x128xf32> to vector<8x128xbf16>
    %c0_7 = arith.constant 0 : index
    %c0_8 = arith.constant 0 : index
    %15 = vector.load %arg3[%c0_7, %c0_8] : memref<128x128xbf16, #tpu.memory_space<vmem>>, vector<128x128xbf16>
    %cst_9 = arith.constant dense<0.000000e+00> : vector<8x128xf32>
    %16 = tpu.matmul %14, %15, %cst_9 {dimension_numbers = #tpu.dot_dimension_numbers<[1], [0], [0], [1], [0, 0, 1, 1], [], []>} : vector<8x128xbf16>, vector<128x128xbf16>, vector<8x128xf32> -> vector<8x128xf32>
    %c0_10 = arith.constant 0 : index
    %c0_11 = arith.constant 0 : index
    %17 = vector.load %arg4[%c0_10, %c0_11] : memref<1x128xf32, #tpu.memory_space<vmem>>, vector<1x128xf32>
    %18 = vector.broadcast %17 : vector<1x128xf32> to vector<8x128xf32>
    %19 = arith.addf %16, %18 : vector<8x128xf32>
    %cst_12 = arith.constant 2.000000e+01 : f32
    %20 = vector.broadcast %cst_12 : f32 to vector<8x128xf32>
    %21 = arith.cmpf ogt, %19, %20 : vector<8x128xf32>
    %cst_13 = arith.constant 2.000000e+01 : f32
    %22 = vector.broadcast %cst_13 : f32 to vector<8x128xf32>
    %23 = arith.minimumf %19, %22 : vector<8x128xf32>
    %24 = math.exp %23 : vector<8x128xf32>
    %25 = math.log1p %24 : vector<8x128xf32>
    %26 = arith.select %21, %19, %25 : vector<8x128xi1>, vector<8x128xf32>
    %27 = arith.truncf %26 : vector<8x128xf32> to vector<8x128xbf16>
    %c0_14 = arith.constant 0 : index
    %c0_15 = arith.constant 0 : index
    %28 = vector.load %arg5[%c0_14, %c0_15] : memref<128x32xbf16, #tpu.memory_space<vmem>>, vector<128x32xbf16>
    %cst_16 = arith.constant dense<0.000000e+00> : vector<8x32xf32>
    %29 = tpu.matmul %27, %28, %cst_16 {dimension_numbers = #tpu.dot_dimension_numbers<[1], [0], [0], [1], [0, 0, 1, 1], [], []>} : vector<8x128xbf16>, vector<128x32xbf16>, vector<8x32xf32> -> vector<8x32xf32>
    %c0_17 = arith.constant 0 : index
    %c0_18 = arith.constant 0 : index
    %30 = vector.load %arg6[%c0_17, %c0_18] : memref<1x32xf32, #tpu.memory_space<vmem>>, vector<1x32xf32>
    %31 = vector.broadcast %30 : vector<1x32xf32> to vector<8x32xf32>
    %32 = arith.addf %29, %31 : vector<8x32xf32>
    %cst_19 = arith.constant dense<0.000000e+00> : vector<32xf32>
    %33 = vector.multi_reduction <add>, %32, %cst_19 [0] : vector<8x32xf32> to vector<32xf32>
    %34 = vector.shape_cast %33 : vector<32xf32> to vector<1x32xf32>
    %cst_20 = arith.constant 8.000000e+00 : f32
    %35 = vector.broadcast %cst_20 : f32 to vector<1x32xf32>
    %36 = arith.divf %34, %35 : vector<1x32xf32>
    %37 = vector.broadcast %36 : vector<1x32xf32> to vector<8x32xf32>
    %38 = arith.subf %32, %37 : vector<8x32xf32>
    %39 = arith.mulf %38, %38 : vector<8x32xf32>
    %cst_21 = arith.constant dense<0.000000e+00> : vector<32xf32>
    %40 = vector.multi_reduction <add>, %39, %cst_21 [0] : vector<8x32xf32> to vector<32xf32>
    %41 = vector.shape_cast %40 : vector<32xf32> to vector<1x32xf32>
    %cst_22 = arith.constant 8.000000e+00 : f32
    %42 = vector.broadcast %cst_22 : f32 to vector<1x32xf32>
    %43 = arith.divf %41, %42 : vector<1x32xf32>
    %44 = vector.broadcast %36 : vector<1x32xf32> to vector<8x32xf32>
    %45 = arith.subf %32, %44 : vector<8x32xf32>
    %cst_23 = arith.constant 9.99999974E-6 : f32
    %46 = vector.broadcast %cst_23 : f32 to vector<1x32xf32>
    %47 = arith.addf %43, %46 : vector<1x32xf32>
    %48 = math.rsqrt %47 : vector<1x32xf32>
    %49 = vector.broadcast %48 : vector<1x32xf32> to vector<8x32xf32>
    %50 = arith.mulf %45, %49 : vector<8x32xf32>
    %51 = vector.extract_strided_slice %50 {offsets = [0, 0], sizes = [8, 16], strides = [1, 1]} : vector<8x32xf32> to vector<8x16xf32>
    %52 = vector.extract_strided_slice %50 {offsets = [0, 16], sizes = [8, 16], strides = [1, 1]} : vector<8x32xf32> to vector<8x16xf32>
    %53 = math.exp %52 : vector<8x16xf32>
    %c0_24 = arith.constant 0 : index
    %c0_25 = arith.constant 0 : index
    %54 = vector.load %arg7[%c0_24, %c0_25] : memref<8x16xf32, #tpu.memory_space<vmem>>, vector<8x16xf32>
    %55 = math.sqrt %53 : vector<8x16xf32>
    %56 = arith.mulf %54, %55 : vector<8x16xf32>
    %57 = arith.addf %56, %51 : vector<8x16xf32>
    %cst_26 = arith.constant dense<0xFF800000> : vector<8xf32>
    %58 = vector.multi_reduction <maximumf>, %57, %cst_26 [1] : vector<8x16xf32> to vector<8xf32>
    %59 = vector.shape_cast %58 : vector<8xf32> to vector<8x1xf32>
    %60 = vector.broadcast %59 : vector<8x1xf32> to vector<8x16xf32>
    %61 = arith.subf %57, %60 : vector<8x16xf32>
    %62 = math.exp %61 : vector<8x16xf32>
    %cst_27 = arith.constant dense<0.000000e+00> : vector<8xf32>
    %63 = vector.multi_reduction <add>, %62, %cst_27 [1] : vector<8x16xf32> to vector<8xf32>
    %64 = vector.shape_cast %63 : vector<8xf32> to vector<8x1xf32>
    %65 = vector.broadcast %64 : vector<8x1xf32> to vector<8x16xf32>
    %66 = arith.divf %62, %65 : vector<8x16xf32>
    %67 = arith.truncf %66 : vector<8x16xf32> to vector<8x16xbf16>
    %c0_28 = arith.constant 0 : index
    %c0_29 = arith.constant 0 : index
    %68 = vector.load %arg8[%c0_28, %c0_29] : memref<16x256xbf16, #tpu.memory_space<vmem>>, vector<16x256xbf16>
    %cst_30 = arith.constant dense<0.000000e+00> : vector<8x256xf32>
    %69 = tpu.matmul %67, %68, %cst_30 {dimension_numbers = #tpu.dot_dimension_numbers<[1], [0], [0], [1], [0, 0, 1, 1], [], []>} : vector<8x16xbf16>, vector<16x256xbf16>, vector<8x256xf32> -> vector<8x256xf32>
    %cst_31 = arith.constant dense<0.000000e+00> : vector<256xf32>
    %70 = vector.multi_reduction <add>, %69, %cst_31 [0] : vector<8x256xf32> to vector<256xf32>
    %71 = vector.shape_cast %70 : vector<256xf32> to vector<1x256xf32>
    %cst_32 = arith.constant 8.000000e+00 : f32
    %72 = vector.broadcast %cst_32 : f32 to vector<1x256xf32>
    %73 = arith.divf %71, %72 : vector<1x256xf32>
    %74 = vector.broadcast %73 : vector<1x256xf32> to vector<8x256xf32>
    %75 = arith.subf %69, %74 : vector<8x256xf32>
    %76 = arith.mulf %75, %75 : vector<8x256xf32>
    %cst_33 = arith.constant dense<0.000000e+00> : vector<256xf32>
    %77 = vector.multi_reduction <add>, %76, %cst_33 [0] : vector<8x256xf32> to vector<256xf32>
    %78 = vector.shape_cast %77 : vector<256xf32> to vector<1x256xf32>
    %cst_34 = arith.constant 8.000000e+00 : f32
    %79 = vector.broadcast %cst_34 : f32 to vector<1x256xf32>
    %80 = arith.divf %78, %79 : vector<1x256xf32>
    %81 = vector.broadcast %73 : vector<1x256xf32> to vector<8x256xf32>
    %82 = arith.subf %69, %81 : vector<8x256xf32>
    %cst_35 = arith.constant 9.99999974E-6 : f32
    %83 = vector.broadcast %cst_35 : f32 to vector<1x256xf32>
    %84 = arith.addf %80, %83 : vector<1x256xf32>
    %85 = math.rsqrt %84 : vector<1x256xf32>
    %86 = vector.broadcast %85 : vector<1x256xf32> to vector<8x256xf32>
    %87 = arith.mulf %82, %86 : vector<8x256xf32>
    %cst_36 = arith.constant dense<0xFF800000> : vector<8xf32>
    %88 = vector.multi_reduction <maximumf>, %87, %cst_36 [1] : vector<8x256xf32> to vector<8xf32>
    %89 = vector.shape_cast %88 : vector<8xf32> to vector<8x1xf32>
    %90 = vector.broadcast %89 : vector<8x1xf32> to vector<8x256xf32>
    %91 = arith.subf %87, %90 : vector<8x256xf32>
    %92 = math.exp %91 : vector<8x256xf32>
    %cst_37 = arith.constant dense<0.000000e+00> : vector<8xf32>
    %93 = vector.multi_reduction <add>, %92, %cst_37 [1] : vector<8x256xf32> to vector<8xf32>
    %94 = vector.shape_cast %93 : vector<8xf32> to vector<8x1xf32>
    %95 = vector.broadcast %94 : vector<8x1xf32> to vector<8x256xf32>
    %96 = arith.divf %92, %95 : vector<8x256xf32>
    %cst_38 = arith.constant 0.000000e+00 : f32
    %97 = vector.broadcast %cst_38 : f32 to vector<8x64xf32>
    %98 = tpu.concatenate %50, %53, %66, %97 in 1 : vector<8x32xf32>, vector<8x16xf32>, vector<8x16xf32>, vector<8x64xf32> -> vector<8x128xf32>
    %c0_39 = arith.constant 0 : index
    %c0_40 = arith.constant 0 : index
    %99 = vector.load %arg9[%c0_39, %c0_40] : memref<8x128xf32, #tpu.memory_space<vmem>>, vector<8x128xf32>
    tpu.vector_store %arg9[%c0_39, %c0_40], %98 {strides = array<i32>} : memref<8x128xf32, #tpu.memory_space<vmem>>, vector<8x128xf32>,
    %c0_41 = arith.constant 0 : index
    %c0_42 = arith.constant 0 : index
    %100 = vector.load %arg10[%c0_41, %c0_42] : memref<8x256xf32, #tpu.memory_space<vmem>>, vector<8x256xf32>
    tpu.vector_store %arg10[%c0_41, %c0_42], %96 {strides = array<i32>} : memref<8x256xf32, #tpu.memory_space<vmem>>, vector<8x256xf32>,
    return
  }
}

</mosaic_0001>

<llo_original>
// kernel: tpu_custom_call.1
$region0: #{tpu_custom_call.1}
  #allocation0 [shape = 'u32[]', space=smem, size = 0x4, offset = 0x4, fixed_abs, tag = 'smem constant byte address 0x4 - core index']
  #allocation1 [shape = 'u32[72,128]{1,0:T(1,128)}', space=vmem, size = 0x9000, scoped, tag = 'internal scratch']
  %s0 = inlined_call_operand.vmem [shape: f32[8,256], index: 0, kind: input, shape index: {}]
  %s1 = inlined_call_operand.hbm [shape: bf16[256,128], index: 1, kind: input, shape index: {}]
  %s2 = inlined_call_operand.vmem [shape: f32[1,128], index: 2, kind: input, shape index: {}]
  %s3 = inlined_call_operand.vmem [shape: bf16[128,128], index: 3, kind: input, shape index: {}]
  %s4 = inlined_call_operand.vmem [shape: f32[1,128], index: 4, kind: input, shape index: {}]
  %s5 = inlined_call_operand.vmem [shape: bf16[128,32], index: 5, kind: input, shape index: {}]
  %s6 = inlined_call_operand.vmem [shape: f32[1,32], index: 6, kind: input, shape index: {}]
  %s7 = inlined_call_operand.hbm [shape: f32[8,16], index: 7, kind: input, shape index: {}]
  %s8 = inlined_call_operand.hbm [shape: bf16[16,256], index: 8, kind: input, shape index: {}]
  %s9 = inlined_call_operand.hbm [shape: f32[8,128], index: 9, kind: output, shape index: {0}]
  %s10 = inlined_call_operand.hbm [shape: f32[8,256], index: 10, kind: output, shape index: {1}]
  %11 = xla_tuple %s9, %s10
  %s12 = sld [smem:[#allocation0]]
  $region66: #{tpu_custom_call.1} parent=0
    _
  %s14 = ssub.s32 1, %s12
  %s15 = scalar_select 0, %s14, %s12
  $region1: #{tpu_custom_call.1} parent=0
    #allocation2 [shape = 'u8[65536]{0}', space=vmem, size = 0x10000, scoped, tag = 'input window, operand 1, single buffered']
    #allocation3 [shape = 's32[1]{0}', space=sflag, size = 0x4, scoped, tag = 'scoped memory for tpu_custom_call.1']
    #allocation4 [shape = 's32[1]{0}', space=sflag, size = 0x4, scoped, tag = 'scoped memory for tpu_custom_call.1']
    #allocation5 [shape = 'u8[4096]{0}', space=vmem, size = 0x1000, scoped, tag = 'input window, operand 7, single buffered']
    #allocation6 [shape = 's32[1]{0}', space=sflag, size = 0x4, scoped, tag = 'scoped memory for tpu_custom_call.1']
    #allocation7 [shape = 'u8[8192]{0}', space=vmem, size = 0x2000, scoped, tag = 'input window, operand 8, single buffered']
    #allocation8 [shape = 'u8[4096]{0}', space=vmem, size = 0x1000, scoped, tag = 'output window, operand 0, single buffered']
    #allocation9 [shape = 'u8[8192]{0}', space=vmem, size = 0x2000, scoped, tag = 'output window, operand 1, single buffered']
    #allocation10 [shape = 's32[1]{0}', space=sflag, size = 0x4, scoped, tag = 'scoped memory for tpu_custom_call.1']
    %16 = vsyncpa [#allocation3], 0
    %17 = vsyncpa [#allocation6], 0
    %18 = vsyncpa [#allocation4], 0
    %19 = vsyncpa [#allocation10], 0
    // Predicated region
    $region2: #{tpu_custom_call.1} parent=1 // pred_check
      _
    $region3: #{tpu_custom_call.1} parent=1 // pred_check_branch
      %21 = sbr.rel (0) target = $region5
    $region4: #{tpu_custom_call.1} parent=1 // pred_region
      _
    $region5: #{tpu_custom_call.1} parent=1 // pred_fallthru
      _
    // Predicated region
    $region6: #{tpu_custom_call.1} parent=1 // pred_check
      _
    $region7: #{tpu_custom_call.1} parent=1 // pred_check_branch
      %23 = sbr.rel (0) target = $region9
    $region8: #{tpu_custom_call.1} parent=1 // pred_region
      %25 = vsyncadd [#allocation3], 0
      %s26 = sshll.u32 %s1, 4
      %s27 = int_to_ptr.hbm [resolvable:$true] %s26
      %s28 = sshll.u32 [#allocation2], 4
      %s29 = int_to_ptr.vmem [resolvable:$true] %s28
      %34 = dma.hbm_to_vmem [thread:$0]  %s27, 2048, %s29, [#allocation3], 64, 64, 4
    $region9: #{tpu_custom_call.1} parent=1 // pred_fallthru
      _
    // Predicated region
    $region10: #{tpu_custom_call.1} parent=1 // pred_check
      _
    $region11: #{tpu_custom_call.1} parent=1 // pred_check_branch
      %36 = sbr.rel (0) target = $region13
    $region12: #{tpu_custom_call.1} parent=1 // pred_region
      _
    $region13: #{tpu_custom_call.1} parent=1 // pred_fallthru
      _
    // Predicated region
    $region14: #{tpu_custom_call.1} parent=1 // pred_check
      _
    $region15: #{tpu_custom_call.1} parent=1 // pred_check_branch
      %38 = sbr.rel (0) target = $region17
    $region16: #{tpu_custom_call.1} parent=1 // pred_region
      _
    $region17: #{tpu_custom_call.1} parent=1 // pred_fallthru
      _
    // Predicated region
    $region18: #{tpu_custom_call.1} parent=1 // pred_check
      _
    $region19: #{tpu_custom_call.1} parent=1 // pred_check_branch
      %40 = sbr.rel (0) target = $region21
    $region20: #{tpu_custom_call.1} parent=1 // pred_region
      _
    $region21: #{tpu_custom_call.1} parent=1 // pred_fallthru
      _
    // Predicated region
    $region22: #{tpu_custom_call.1} parent=1 // pred_check
      _
    $region23: #{tpu_custom_call.1} parent=1 // pred_check_branch
      %42 = sbr.rel (0) target = $region25
    $region24: #{tpu_custom_call.1} parent=1 // pred_region
      _
    $region25: #{tpu_custom_call.1} parent=1 // pred_fallthru
      _
    // Predicated region
    $region26: #{tpu_custom_call.1} parent=1 // pred_check
      _
    $region27: #{tpu_custom_call.1} parent=1 // pred_check_branch
      %44 = sbr.rel (0) target = $region29
    $region28: #{tpu_custom_call.1} parent=1 // pred_region
      _
    $region29: #{tpu_custom_call.1} parent=1 // pred_fallthru
      _
    // Predicated region
    $region30: #{tpu_custom_call.1} parent=1 // pred_check
      _
    $region31: #{tpu_custom_call.1} parent=1 // pred_check_branch
      %46 = sbr.rel (0) target = $region33
    $region32: #{tpu_custom_call.1} parent=1 // pred_region
      %48 = vsyncadd [#allocation6], 0
      %s50 = sshll.u32 %s7, 4
      %s51 = int_to_ptr.hbm [resolvable:$true] %s50
      %s52 = sshll.u32 [#allocation5], 4
      %s53 = int_to_ptr.vmem [resolvable:$true] %s52
      %55 = dma.hbm_to_vmem [thread:$0]  %s51, 128, %s53, [#allocation6]
    $region33: #{tpu_custom_call.1} parent=1 // pred_fallthru
      _
    // Predicated region
    $region34: #{tpu_custom_call.1} parent=1 // pred_check
      _
    $region35: #{tpu_custom_call.1} parent=1 // pred_check_branch
      %57 = sbr.rel (0) target = $region37
    $region36: #{tpu_custom_call.1} parent=1 // pred_region
      %59 = vsyncadd [#allocation6], 0
      %s60 = sshll.u32 %s8, 4
      %s61 = int_to_ptr.hbm [resolvable:$true] %s60
      %s62 = sshll.u32 [#allocation7], 4
      %s63 = int_to_ptr.vmem [resolvable:$true] %s62
      %68 = dma.hbm_to_vmem [thread:$0]  %s61, 256, %s63, [#allocation6], 128, 128, 8
    $region37: #{tpu_custom_call.1} parent=1 // pred_fallthru
      _
    // Predicated region
    $region38: #{tpu_custom_call.1} parent=1 // pred_check
      _
    $region39: #{tpu_custom_call.1} parent=1 // pred_check_branch
      %70 = sbr.rel (0) target = $region41
    $region40: #{tpu_custom_call.1} parent=1 // pred_region
      %72 = dma.done [#allocation3], 2048
    $region41: #{tpu_custom_call.1} parent=1 // pred_fallthru
      _
    // Predicated region
    $region42: #{tpu_custom_call.1} parent=1 // pred_check
      _
    $region43: #{tpu_custom_call.1} parent=1 // pred_check_branch
      %74 = sbr.rel (0) target = $region45
    $region44: #{tpu_custom_call.1} parent=1 // pred_region
      %76 = dma.done [#allocation6], 128
    $region45: #{tpu_custom_call.1} parent=1 // pred_fallthru
      _
    // Predicated region
    $region46: #{tpu_custom_call.1} parent=1 // pred_check
      _
    $region47: #{tpu_custom_call.1} parent=1 // pred_check_branch
      %78 = sbr.rel (0) target = $region49
    $region48: #{tpu_custom_call.1} parent=1 // pred_region
      %80 = dma.done [#allocation6], 256
    $region49: #{tpu_custom_call.1} parent=1 // pred_fallthru
      _
    %v82 = vld [vmem:[%s0] sm:$0xff]
    %v83 = vld [vmem:[%s0 + $0x8] sm:$0xff]
    %v84 = vpack.c.bf16 %v82, %v82
    %v85 = vpack.c.bf16 %v83, %v83
    %v86 = vld [vmem:[#allocation2] sm:$0xf]
    %v87 = vld [vmem:[#allocation2 + $0x4] sm:$0xf]
    %v88 = vld [vmem:[#allocation2 + $0x8] sm:$0xf]
    %v89 = vld [vmem:[#allocation2 + $0xc] sm:$0xf]
    %v90 = vld [vmem:[#allocation2 + $0x10] sm:$0xf]
    %v91 = vld [vmem:[#allocation2 + $0x14] sm:$0xf]
    %v92 = vld [vmem:[#allocation2 + $0x18] sm:$0xf]
    %v93 = vld [vmem:[#allocation2 + $0x1c] sm:$0xf]
    %v94 = vld [vmem:[#allocation2 + $0x20] sm:$0xf]
    %v95 = vld [vmem:[#allocation2 + $0x24] sm:$0xf]
    %v96 = vld [vmem:[#allocation2 + $0x28] sm:$0xf]
    %v97 = vld [vmem:[#allocation2 + $0x2c] sm:$0xf]
    %v98 = vld [vmem:[#allocation2 + $0x30] sm:$0xf]
    %v99 = vld [vmem:[#allocation2 + $0x34] sm:$0xf]
    %v100 = vld [vmem:[#allocation2 + $0x38] sm:$0xf]
    %v101 = vld [vmem:[#allocation2 + $0x3c] sm:$0xf]
    %v102 = vld [vmem:[#allocation2 + $0x40] sm:$0xf]
    %v103 = vld [vmem:[#allocation2 + $0x44] sm:$0xf]
    %v104 = vld [vmem:[#allocation2 + $0x48] sm:$0xf]
    %v105 = vld [vmem:[#allocation2 + $0x4c] sm:$0xf]
    %v106 = vld [vmem:[#allocation2 + $0x50] sm:$0xf]
    %v107 = vld [vmem:[#allocation2 + $0x54] sm:$0xf]
    %v108 = vld [vmem:[#allocation2 + $0x58] sm:$0xf]
    %v109 = vld [vmem:[#allocation2 + $0x5c] sm:$0xf]
    %v110 = vld [vmem:[#allocation2 + $0x60] sm:$0xf]
    %v111 = vld [vmem:[#allocation2 + $0x64] sm:$0xf]
    %v112 = vld [vmem:[#allocation2 + $0x68] sm:$0xf]
    %v113 = vld [vmem:[#allocation2 + $0x6c] sm:$0xf]
    %v114 = vld [vmem:[#allocation2 + $0x70] sm:$0xf]
    %v115 = vld [vmem:[#allocation2 + $0x74] sm:$0xf]
    %v116 = vld [vmem:[#allocation2 + $0x78] sm:$0xf]
    %v117 = vld [vmem:[#allocation2 + $0x7c] sm:$0xf]
    %v118 = vld [vmem:[%s2] sm:$0x1]
    %v120 = vperm.slane %v118, 0
    %v154 = vunpack.c.l.b16 %v86
    %v155 = vunpack.c.l.b16 %v87
    %v156 = vunpack.c.l.b16 %v88
    %v157 = vunpack.c.l.b16 %v89
    %v158 = vunpack.c.l.b16 %v90
    %v159 = vunpack.c.l.b16 %v91
    %v160 = vunpack.c.l.b16 %v92
    %v161 = vunpack.c.l.b16 %v93
    %v162 = vunpack.c.l.b16 %v94
    %v163 = vunpack.c.l.b16 %v95
    %v164 = vunpack.c.l.b16 %v96
    %v165 = vunpack.c.l.b16 %v97
    %v166 = vunpack.c.l.b16 %v98
    %v167 = vunpack.c.l.b16 %v99
    %v168 = vunpack.c.l.b16 %v100
    %v169 = vunpack.c.l.b16 %v101
    %v170 = vunpack.c.l.b16 %v102
    %v171 = vunpack.c.l.b16 %v103
    %v172 = vunpack.c.l.b16 %v104
    %v173 = vunpack.c.l.b16 %v105
    %v174 = vunpack.c.l.b16 %v106
    %v175 = vunpack.c.l.b16 %v107
    %v176 = vunpack.c.l.b16 %v108
    %v177 = vunpack.c.l.b16 %v109
    %v178 = vunpack.c.l.b16 %v110
    %v179 = vunpack.c.l.b16 %v111
    %v180 = vunpack.c.l.b16 %v112
    %v181 = vunpack.c.l.b16 %v113
    %v182 = vunpack.c.l.b16 %v114
    %v183 = vunpack.c.l.b16 %v115
    %v184 = vunpack.c.l.b16 %v116
    %v185 = vunpack.c.l.b16 %v117
    %v186 = vpack.c.b16 %v155, %v154
    %v187 = vpack.c.b16 %v157, %v156
    %v188 = vpack.c.b16 %v159, %v158
    %v189 = vpack.c.b16 %v161, %v160
    %v190 = vpack.c.b16 %v163, %v162
    %v191 = vpack.c.b16 %v165, %v164
    %v192 = vpack.c.b16 %v167, %v166
    %v193 = vpack.c.b16 %v169, %v168
    %v194 = vpack.c.b16 %v171, %v170
    %v195 = vpack.c.b16 %v173, %v172
    %v196 = vpack.c.b16 %v175, %v174
    %v197 = vpack.c.b16 %v177, %v176
    %v198 = vpack.c.b16 %v179, %v178
    %v199 = vpack.c.b16 %v181, %v180
    %v200 = vpack.c.b16 %v183, %v182
    %v201 = vpack.c.b16 %v185, %v184
    %218 = vmatpush.bf16.msra.mxu0 %v193
    %219 = vmatpush.bf16.msra.mxu0 %v192
    %220 = vmatpush.bf16.msra.mxu0 %v191
    %221 = vmatpush.bf16.msra.mxu0 %v190
    %222 = vmatpush.bf16.msra.mxu0 %v189
    %223 = vmatpush.bf16.msra.mxu0 %v188
    %224 = vmatpush.bf16.msra.mxu0 %v187
    %225 = vmatpush.bf16.msra.mxu0 %v186
    %226 = vmatmul.bf16.gmra.mxu0 %v84
    %v227 = vpop.f32.mrf.mxu0
    %v228 = vadd.f32 %v120, %v227
    %v229 = vpop.f32.mrf.mxu0
    %230 = vdwg.mxu0
    %231 = vmatpush.bf16.msra.mxu0 %v201
    %232 = vmatpush.bf16.msra.mxu0 %v200
    %233 = vmatpush.bf16.msra.mxu0 %v199
    %234 = vmatpush.bf16.msra.mxu0 %v198
    %235 = vmatpush.bf16.msra.mxu0 %v197
    %236 = vmatpush.bf16.msra.mxu0 %v196
    %237 = vmatpush.bf16.msra.mxu0 %v195
    %238 = vmatpush.bf16.msra.mxu0 %v194
    %239 = vmatmul.bf16.gmra.mxu0 %v85
    %v240 = vpop.f32.mrf.mxu0
    %v241 = vadd.f32 %v228, %v240
    %v242 = vpop.f32.mrf.mxu0
    %243 = vdwg.mxu0
    %vm244 = vcmp.gt.f32.partialorder %v241, 20.0
    %v245 = vmin.f32 %v241, 20.0
    %v246 = vmul.f32 %v245, 1.442695
    %v247 = vpow.pop %v246
    %v248 = vadd.f32 %v247, 1.0
    %v249 = vlog2.pop %v248
    %v250 = vmul.f32 %v249, 0.6931472
    %v251 = vmul.f32 -0.5, %v247
    %v252 = vadd.f32 %v251, 1.0
    %v253 = vmul.f32 %v252, %v247
    %v254 = vand.u32 2147483647, %v247
    %vm255 = vcmp.lt.f32.partialorder %v254, 0.0004427343
    %v256 = vsel %vm255, %v253, %v250
    %v257 = vsel %vm244, %v241, %v256
    %v258 = vpack.c.bf16 %v257, %v257
    %v259 = vld [vmem:[%s3] sm:$0xf]
    %v260 = vld [vmem:[%s3 + $0x4] sm:$0xf]
    %v261 = vld [vmem:[%s3 + $0x8] sm:$0xf]
    %v262 = vld [vmem:[%s3 + $0xc] sm:$0xf]
    %v263 = vld [vmem:[%s3 + $0x10] sm:$0xf]
    %v264 = vld [vmem:[%s3 + $0x14] sm:$0xf]
    %v265 = vld [vmem:[%s3 + $0x18] sm:$0xf]
    %v266 = vld [vmem:[%s3 + $0x1c] sm:$0xf]
    %v267 = vld [vmem:[%s3 + $0x20] sm:$0xf]
    %v268 = vld [vmem:[%s3 + $0x24] sm:$0xf]
    %v269 = vld [vmem:[%s3 + $0x28] sm:$0xf]
    %v270 = vld [vmem:[%s3 + $0x2c] sm:$0xf]
    %v271 = vld [vmem:[%s3 + $0x30] sm:$0xf]
    %v272 = vld [vmem:[%s3 + $0x34] sm:$0xf]
    %v273 = vld [vmem:[%s3 + $0x38] sm:$0xf]
    %v274 = vld [vmem:[%s3 + $0x3c] sm:$0xf]
    %v275 = vld [vmem:[%s4] sm:$0x1]
    %v277 = vperm.slane %v275, 0
    %v295 = vunpack.c.l.b16 %v259
    %v296 = vunpack.c.l.b16 %v260
    %v297 = vunpack.c.l.b16 %v261
    %v298 = vunpack.c.l.b16 %v262
    %v299 = vunpack.c.l.b16 %v263
    %v300 = vunpack.c.l.b16 %v264
    %v301 = vunpack.c.l.b16 %v265
    %v302 = vunpack.c.l.b16 %v266
    %v303 = vunpack.c.l.b16 %v267
    %v304 = vunpack.c.l.b16 %v268
    %v305 = vunpack.c.l.b16 %v269
    %v306 = vunpack.c.l.b16 %v270
    %v307 = vunpack.c.l.b16 %v271
    %v308 = vunpack.c.l.b16 %v272
    %v309 = vunpack.c.l.b16 %v273
    %v310 = vunpack.c.l.b16 %v274
    %v311 = vpack.c.b16 %v296, %v295
    %v312 = vpack.c.b16 %v298, %v297
    %v313 = vpack.c.b16 %v300, %v299
    %v314 = vpack.c.b16 %v302, %v301
    %v315 = vpack.c.b16 %v304, %v303
    %v316 = vpack.c.b16 %v306, %v305
    %v317 = vpack.c.b16 %v308, %v307
    %v318 = vpack.c.b16 %v310, %v309
    %327 = vmatpush.bf16.msra.mxu0 %v318
    %328 = vmatpush.bf16.msra.mxu0 %v317
    %329 = vmatpush.bf16.msra.mxu0 %v316
    %330 = vmatpush.bf16.msra.mxu0 %v315
    %331 = vmatpush.bf16.msra.mxu0 %v314
    %332 = vmatpush.bf16.msra.mxu0 %v313
    %333 = vmatpush.bf16.msra.mxu0 %v312
    %334 = vmatpush.bf16.msra.mxu0 %v311
    %335 = vmatmul.bf16.gmra.mxu0 %v258
    %v336 = vpop.f32.mrf.mxu0
    %v337 = vadd.f32 %v277, %v336
    %v338 = vpop.f32.mrf.mxu0
    %339 = vdwg.mxu0
    %vm340 = vcmp.gt.f32.partialorder %v337, 20.0
    %v341 = vmin.f32 %v337, 20.0
    %v342 = vmul.f32 %v341, 1.442695
    %v343 = vpow.pop %v342
    %v344 = vadd.f32 %v343, 1.0
    %v345 = vlog2.pop %v344
    %v346 = vmul.f32 %v345, 0.6931472
    %v347 = vmul.f32 -0.5, %v343
    %v348 = vadd.f32 %v347, 1.0
    %v349 = vmul.f32 %v348, %v343
    %v350 = vand.u32 2147483647, %v343
    %vm351 = vcmp.lt.f32.partialorder %v350, 0.0004427343
    %v352 = vsel %vm351, %v349, %v346
    %v353 = vsel %vm340, %v337, %v352
    %v354 = vpack.c.bf16 %v353, %v353
    %v355 = vld [vmem:[%s5] sm:$0xf]
    %v356 = vld [vmem:[%s5 + $0x4] sm:$0xf]
    %v357 = vld [vmem:[%s5 + $0x8] sm:$0xf]
    %v358 = vld [vmem:[%s5 + $0xc] sm:$0xf]
    %v359 = vld [vmem:[%s5 + $0x10] sm:$0xf]
    %v360 = vld [vmem:[%s5 + $0x14] sm:$0xf]
    %v361 = vld [vmem:[%s5 + $0x18] sm:$0xf]
    %v362 = vld [vmem:[%s5 + $0x1c] sm:$0xf]
    %v363 = vld [vmem:[%s5 + $0x20] sm:$0xf]
    %v364 = vld [vmem:[%s5 + $0x24] sm:$0xf]
    %v365 = vld [vmem:[%s5 + $0x28] sm:$0xf]
    %v366 = vld [vmem:[%s5 + $0x2c] sm:$0xf]
    %v367 = vld [vmem:[%s5 + $0x30] sm:$0xf]
    %v368 = vld [vmem:[%s5 + $0x34] sm:$0xf]
    %v369 = vld [vmem:[%s5 + $0x38] sm:$0xf]
    %v370 = vld [vmem:[%s5 + $0x3c] sm:$0xf]
    %v371 = vld [vmem:[%s6] sm:$0x1]
    %v373 = vperm.slane %v371, 0
    %v391 = vunpack.c.l.b16 %v355
    %v392 = vunpack.c.l.b16 %v356
    %v393 = vunpack.c.l.b16 %v357
    %v394 = vunpack.c.l.b16 %v358
    %v395 = vunpack.c.l.b16 %v359
    %v396 = vunpack.c.l.b16 %v360
    %v397 = vunpack.c.l.b16 %v361
    %v398 = vunpack.c.l.b16 %v362
    %v399 = vunpack.c.l.b16 %v363
    %v400 = vunpack.c.l.b16 %v364
    %v401 = vunpack.c.l.b16 %v365
    %v402 = vunpack.c.l.b16 %v366
    %v403 = vunpack.c.l.b16 %v367
    %v404 = vunpack.c.l.b16 %v368
    %v405 = vunpack.c.l.b16 %v369
    %v406 = vunpack.c.l.b16 %v370
    %v407 = vpack.c.b16 %v392, %v391
    %v408 = vpack.c.b16 %v394, %v393
    %v409 = vpack.c.b16 %v396, %v395
    %v410 = vpack.c.b16 %v398, %v397
    %v411 = vpack.c.b16 %v400, %v399
    %v412 = vpack.c.b16 %v402, %v401
    %v413 = vpack.c.b16 %v404, %v403
    %v414 = vpack.c.b16 %v406, %v405
    %423 = vmatpush.bf16.msra.mxu0 %v414
    %424 = vmatpush.bf16.msra.mxu0 %v413
    %425 = vmatpush.bf16.msra.mxu0 %v412
    %426 = vmatpush.bf16.msra.mxu0 %v411
    %427 = vmatpush.bf16.msra.mxu0 %v410
    %428 = vmatpush.bf16.msra.mxu0 %v409
    %429 = vmatpush.bf16.msra.mxu0 %v408
    %430 = vmatpush.bf16.msra.mxu0 %v407
    %431 = vmatmul.bf16.gmra.mxu0 %v354
    %v432 = vpop.f32.mrf.mxu0
    %v433 = vadd.f32 %v373, %v432
    %v434 = vpop.f32.mrf.mxu0
    %435 = vdwg.mxu0
    %vm436 = vcmask 261120
    %v437 = vsel %vm436, %v433, 0.0
    %v438 = vrot.slane %v437, 4
    %v439 = vadd.f32 %v437, %v438
    %v440 = vrot.slane %v439, 2
    %v441 = vadd.f32 %v439, %v440
    %v442 = vrot.slane %v441, 1
    %v443 = vadd.f32 %v441, %v442
    %v444 = vrcp.pop 8.0
    %v445 = vmul.f32 8.0, %v444
    %v446 = vsub.f32 1.0, %v445
    %v447 = vmul.f32 %v444, %v446
    %v448 = vadd.f32 %v444, %v447
    %vm449 = vweird.f32 %v444
    %v450 = vsel %vm449, %v444, %v448
    %v451 = vmul.f32 %v443, %v450
    %v452 = vsub.f32 %v433, %v451
    %v453 = vmul.f32 %v452, %v452
    %v454 = vsel %vm436, %v453, 0.0
    %v455 = vrot.slane %v454, 4
    %v456 = vadd.f32 %v454, %v455
    %v457 = vrot.slane %v456, 2
    %v458 = vadd.f32 %v456, %v457
    %v459 = vrot.slane %v458, 1
    %v460 = vadd.f32 %v458, %v459
    %v461 = vmul.f32 %v460, %v450
    %v462 = vadd.f32 %v461, 1e-05
    %v463 = vrsqrt.pop %v462
    %v464 = vmul.f32 %v463, %v462
    %v465 = vmul.f32 %v464, %v463
    %v466 = vmul.f32 0.5, %v465
    %v467 = vsub.f32 1.5, %v466
    %v468 = vmul.f32 %v463, %v467
    %vm469 = vweird.f32 %v462
    %vm470 = vweird.f32 %v463
    %vm471 = vmor %vm469, %vm470
    %v472 = vsel %vm471, %v463, %v468
    %v473 = vmul.f32 %v452, %v472
    %v474 = vmul.f32 %v473, 1.442695
    %v475 = vpow.pop %v474
    %v476 = vld [vmem:[#allocation5] sm:$0xff]
    %v477 = vrsqrt.pop %v475
    %v478 = vmul.f32 %v477, %v475
    %v479 = vmul.f32 %v478, %v477
    %v480 = vmul.f32 0.5, %v479
    %v481 = vsub.f32 1.5, %v480
    %v482 = vmul.f32 %v477, %v481
    %v483 = vmul.f32 %v475, %v482
    %vm484 = vcmp.eq.f32.partialorder %v475, inf
    %v485 = vsel %vm484, %v475, %v483
    %vm486 = vcmp.eq.f32.partialorder %v475, 0.0
    %v487 = vand.u32 %v475, 2147483648
    %v488 = vsel %vm486, %v487, %v485
    %490 = vrot.lane.b32.xlu0 %v488, 112
    %v491 = vpop.permute.xlu0 %490
    %v493 = vmul.f32 %v476, %v491
    %v494 = vadd.f32 %v493, %v473
    %vm495 = vcmask 130048
    %v496 = vsel %vm495, %v494, -inf
    %497 = vmax.xlane.f32.xlu0 %v496
    %v498 = vpop.xlane.xlu0 %497
    %v499 = vsub.f32 %v494, %v498
    %v500 = vmul.f32 %v499, 1.442695
    %v501 = vpow.pop %v500
    %v502 = vsel %vm495, %v501, 0.0
    %503 = vadd.xlane.f32.xlu0 %v502
    %v504 = vpop.xlane.xlu0 %503
    %v505 = vrcp.pop %v504
    %v506 = vmul.f32 %v504, %v505
    %v507 = vsub.f32 1.0, %v506
    %v508 = vmul.f32 %v505, %v507
    %v509 = vadd.f32 %v505, %v508
    %vm510 = vweird.f32 %v504
    %vm511 = vweird.f32 %v505
    %vm512 = vmor %vm510, %vm511
    %v513 = vsel %vm512, %v505, %v509
    %v514 = vand.u32 2147483647, %v504
    %vm515 = vcmp.eq.f32.partialorder %v514, 8.507059e+37
    %v516 = vand.u32 %v504, 2147483648
    %v517 = vor.u32 1.1754944e-38, %v516
    %v518 = vsel %vm515, %v517, %v513
    %v519 = vmul.f32 %v501, %v518
    %v520 = vpack.c.bf16 %v519, %v519
    %v521 = vld [vmem:[#allocation7] sm:$0xff]
    %v522 = vld [vmem:[#allocation7 + $0x8] sm:$0xff]
    %v525 = vunpack.c.l.b16 %v521
    %v526 = vunpack.c.h.b16 %v521
    %v527 = vunpack.c.l.b16 %v522
    %v528 = vunpack.c.h.b16 %v522
    %v529 = vpack.c.b16 %v527, %v525
    %v530 = vpack.c.b16 %v528, %v526
    %v534 = vsel %vm495, %v520, 0
    %536 = vmatpush.bf16.msra.mxu0 0
    %537 = vmatpush.bf16.msra.mxu0 0
    %538 = vmatpush.bf16.msra.mxu0 0
    %539 = vmatpush.bf16.msra.mxu0 0
    %540 = vmatpush.bf16.msra.mxu0 0
    %541 = vmatpush.bf16.msra.mxu0 0
    %542 = vmatpush.bf16.msra.mxu0 0
    %543 = vmatpush.bf16.msra.mxu0 %v529
    %544 = vmatmul.bf16.gmra.mxu0 %v534
    %v545 = vpop.f32.mrf.mxu0
    %v546 = vadd.f32 0.0, %v545
    %v547 = vpop.f32.mrf.mxu0
    %548 = vdwg.mxu0
    %549 = vmatpush.bf16.msra.mxu0 0
    %550 = vmatpush.bf16.msra.mxu0 0
    %551 = vmatpush.bf16.msra.mxu0 0
    %552 = vmatpush.bf16.msra.mxu0 0
    %553 = vmatpush.bf16.msra.mxu0 0
    %554 = vmatpush.bf16.msra.mxu0 0
    %555 = vmatpush.bf16.msra.mxu0 0
    %556 = vmatpush.bf16.msra.mxu0 %v530
    %557 = vmatmul.bf16.gmra.mxu0 %v534
    %v558 = vpop.f32.mrf.mxu0
    %v559 = vadd.f32 0.0, %v558
    %v560 = vpop.f32.mrf.mxu0
    %561 = vdwg.mxu0
    %v562 = vrot.slane %v546, 4
    %v563 = vadd.f32 %v546, %v562
    %v564 = vrot.slane %v563, 2
    %v565 = vadd.f32 %v563, %v564
    %v566 = vrot.slane %v565, 1
    %v567 = vadd.f32 %v565, %v566
    %v568 = vrot.slane %v559, 4
    %v569 = vadd.f32 %v559, %v568
    %v570 = vrot.slane %v569, 2
    %v571 = vadd.f32 %v569, %v570
    %v572 = vrot.slane %v571, 1
    %v573 = vadd.f32 %v571, %v572
    %v574 = vmul.f32 %v567, %v450
    %v575 = vmul.f32 %v573, %v450
    %v576 = vsub.f32 %v546, %v574
    %v577 = vsub.f32 %v559, %v575
    %v578 = vmul.f32 %v576, %v576
    %v579 = vmul.f32 %v577, %v577
    %v580 = vrot.slane %v578, 4
    %v581 = vadd.f32 %v578, %v580
    %v582 = vrot.slane %v581, 2
    %v583 = vadd.f32 %v581, %v582
    %v584 = vrot.slane %v583, 1
    %v585 = vadd.f32 %v583, %v584
    %v586 = vrot.slane %v579, 4
    %v587 = vadd.f32 %v579, %v586
    %v588 = vrot.slane %v587, 2
    %v589 = vadd.f32 %v587, %v588
    %v590 = vrot.slane %v589, 1
    %v591 = vadd.f32 %v589, %v590
    %v592 = vmul.f32 %v585, %v450
    %v593 = vmul.f32 %v591, %v450
    %v594 = vadd.f32 %v592, 1e-05
    %v595 = vadd.f32 %v593, 1e-05
    %v596 = vrsqrt.pop %v594
    %v597 = vmul.f32 %v596, %v594
    %v598 = vmul.f32 %v597, %v596
    %v599 = vmul.f32 0.5, %v598
    %v600 = vsub.f32 1.5, %v599
    %v601 = vmul.f32 %v596, %v600
    %vm602 = vweird.f32 %v594
    %vm603 = vweird.f32 %v596
    %vm604 = vmor %vm602, %vm603
    %v605 = vsel %vm604, %v596, %v601
    %v606 = vrsqrt.pop %v595
    %v607 = vmul.f32 %v606, %v595
    %v608 = vmul.f32 %v607, %v606
    %v609 = vmul.f32 0.5, %v608
    %v610 = vsub.f32 1.5, %v609
    %v611 = vmul.f32 %v606, %v610
    %vm612 = vweird.f32 %v595
    %vm613 = vweird.f32 %v606
    %vm614 = vmor %vm612, %vm613
    %v615 = vsel %vm614, %v606, %v611
    %v616 = vmul.f32 %v576, %v605
    %v617 = vmul.f32 %v577, %v615
    %v618 = vmax.f32 %v616, %v617
    %619 = vmax.xlane.f32.xlu0 %v618
    %v620 = vpop.xlane.xlu0 %619
    %v621 = vsub.f32 %v616, %v620
    %v622 = vsub.f32 %v617, %v620
    %v623 = vmul.f32 %v621, 1.442695
    %v624 = vpow.pop %v623
    %v625 = vmul.f32 %v622, 1.442695
    %v626 = vpow.pop %v625
    %v627 = vadd.f32 %v624, %v626
    %628 = vadd.xlane.f32.xlu0 %v627
    %v629 = vpop.xlane.xlu0 %628
    %v630 = vrcp.pop %v629
    %v631 = vmul.f32 %v629, %v630
    %v632 = vsub.f32 1.0, %v631
    %v633 = vmul.f32 %v630, %v632
    %v634 = vadd.f32 %v630, %v633
    %vm635 = vweird.f32 %v629
    %vm636 = vweird.f32 %v630
    %vm637 = vmor %vm635, %vm636
    %v638 = vsel %vm637, %v630, %v634
    %v639 = vand.u32 2147483647, %v629
    %vm640 = vcmp.eq.f32.partialorder %v639, 8.507059e+37
    %v641 = vand.u32 %v629, 2147483648
    %v642 = vor.u32 1.1754944e-38, %v641
    %v643 = vsel %vm640, %v642, %v638
    %v644 = vmul.f32 %v624, %v643
    %v645 = vmul.f32 %v626, %v643
    %647 = vrot.lane.b32.xlu0 %v475, 16
    %v648 = vpop.permute.xlu0 %647
    %651 = vrot.lane.b32.xlu0 %v519, 48
    %v652 = vpop.permute.xlu0 %651
    %v654 = vsel %vm436, %v473, %v648
    %vm655 = vcmask 392192
    %v656 = vsel %vm655, %v654, %v652
    %vm657 = vcmask 523264
    %v658 = vsel %vm657, %v656, 0.0
    %659 = vst [vmem:[#allocation8] sm:$0xff] %v658
    %660 = vst [vmem:[#allocation9] sm:$0xff] %v644
    %661 = vst [vmem:[#allocation9 + $0x8] sm:$0xff] %v645
    // Predicated region
    $region50: #{tpu_custom_call.1} parent=1 // pred_check
      _
    $region51: #{tpu_custom_call.1} parent=1 // pred_check_branch
      %663 = sbr.rel (0) target = $region53
    $region52: #{tpu_custom_call.1} parent=1 // pred_region
      %665 = vsyncadd [#allocation4], 0
      %s667 = sshll.u32 [#allocation8], 4
      %s668 = int_to_ptr.vmem [resolvable:$true] %s667
      %s669 = sshll.u32 %s9, 4
      %s670 = int_to_ptr.hbm [resolvable:$true] %s669
      %672 = dma.vmem_to_hbm [thread:$0]  %s668, 128, %s670, [#allocation4]
    $region53: #{tpu_custom_call.1} parent=1 // pred_fallthru
      _
    // Predicated region
    $region54: #{tpu_custom_call.1} parent=1 // pred_check
      _
    $region55: #{tpu_custom_call.1} parent=1 // pred_check_branch
      %674 = sbr.rel (0) target = $region57
    $region56: #{tpu_custom_call.1} parent=1 // pred_region
      %676 = vsyncadd [#allocation10], 0
      %s678 = sshll.u32 [#allocation9], 4
      %s679 = int_to_ptr.vmem [resolvable:$true] %s678
      %s680 = sshll.u32 %s10, 4
      %s681 = int_to_ptr.hbm [resolvable:$true] %s680
      %683 = dma.vmem_to_hbm [thread:$0]  %s679, 256, %s681, [#allocation10]
    $region57: #{tpu_custom_call.1} parent=1 // pred_fallthru
      _
    // Predicated region
    $region58: #{tpu_custom_call.1} parent=1 // pred_check
      _
    $region59: #{tpu_custom_call.1} parent=1 // pred_check_branch
      %685 = sbr.rel (0) target = $region61
    $region60: #{tpu_custom_call.1} parent=1 // pred_region
      %687 = dma.done [#allocation4], 128
    $region61: #{tpu_custom_call.1} parent=1 // pred_fallthru
      _
    // Predicated region
    $region62: #{tpu_custom_call.1} parent=1 // pred_check
      _
    $region63: #{tpu_custom_call.1} parent=1 // pred_check_branch
      %689 = sbr.rel (0) target = $region65
    $region64: #{tpu_custom_call.1} parent=1 // pred_region
      %691 = dma.done [#allocation10], 256
    $region65: #{tpu_custom_call.1} parent=1 // pred_fallthru
      _
    %692 = vsyncpa [#allocation3], 1
    %693 = vsyncpa [#allocation6], 1
    %694 = vsyncpa [#allocation4], 1
    %695 = vsyncpa [#allocation10], 1

</llo_original>
